<compile_context>
chip_gen: v6e
topology: v6e:2x2x1
jax: 0.10.0
libtpu: 0.0.40
codegen_flags: <defaults>
</compile_context>

<pallas_src>
import functools

import jax
import jax.numpy as jnp
from jax.experimental import pallas as pl
from jax.experimental.pallas import tpu as pltpu


def _lstm2_kernel(row0_ref, state_ref, w_ref, out_ref, *, H, X):
    """One timestep of a 2-layer LSTM (bias=False), batch=1.

    row0_ref : (1, X+H)     = [x, h0_layer0]              (built in wrapper)
    state_ref: (3, H)       = rows [h0_layer1, c0_layer0, c0_layer1]
    w_ref    : (X+3H, 4H)   = rows [W_ih0; W_hh0; W_hh1; W_ih1]  (transposed)
    out_ref  : (4, H)       = rows [h_new_l0, h_new_l1, c_new_l0, c_new_l1]
    """
    row0 = row0_ref[...]                          # (1, X+H)
    h1 = state_ref[0:1, :]                        # layer-1 previous hidden
    c0 = state_ref[1:2, :]                        # layer-0 previous cell
    c1 = state_ref[2:3, :]                        # layer-1 previous cell

    w0 = w_ref[0:X + H, :]                        # fused [W_ih0; W_hh0]
    whh1 = w_ref[X + H:X + 2 * H, :]
    wih1 = w_ref[X + 2 * H:X + 3 * H, :]

    # Both of these depend only on kernel inputs -> issued back-to-back on the
    # MXU; the layer-1 recurrent dot is hidden under layer-0's drain.
    gates0 = jnp.dot(row0, w0, preferred_element_type=jnp.float32)   # (1, 4H)
    rec1 = jnp.dot(h1, whh1, preferred_element_type=jnp.float32)     # (1, 4H)

    def finish(gates, c_prev):
        # Nonlinearities on the full 4H-lane gate vector, then slice.
        sig = jax.nn.sigmoid(gates)
        th = jnp.tanh(gates)
        i = sig[:, 0 * H:1 * H]
        f = sig[:, 1 * H:2 * H]
        g = th[:, 2 * H:3 * H]
        o = sig[:, 3 * H:4 * H]
        c_new = f * c_prev + i * g
        h_new = o * jnp.tanh(c_new)
        return h_new, c_new

    # ---- layer 0 ----
    h0n, c0n = finish(gates0, c0)

    # ---- layer 1 (only this small dot is serialized behind layer 0) ----
    gates1 = rec1 + jnp.dot(h0n, wih1, preferred_element_type=jnp.float32)
    h1n, c1n = finish(gates1, c1)

    out_ref[0:1, :] = h0n
    out_ref[1:2, :] = h1n
    out_ref[2:3, :] = c0n
    out_ref[3:4, :] = c1n


def pack_lstm_weights(wih0, whh0, wih1, whh1):
    """Pack the four transposed weight matrices ((in, 4H) each) into one slab.

    Row layout: [W_ih0 (X rows); W_hh0 (H); W_hh1 (H); W_ih1 (H)] -> (X+3H, 4H).
    Done once at init so the kernel sees a single weight DMA."""
    return jnp.concatenate([wih0, whh0, whh1, wih1], axis=0).astype(jnp.float32)


def init_policy_params(key, x_dim, h_dim):
    """PyTorch-LSTM-style init U(-1/sqrt(H), 1/sqrt(H)); bias=False (as in Policy).

    Returns the single packed (x_dim + 3*h_dim, 4*h_dim) f32 weight slab."""
    k = 1.0 / jnp.sqrt(jnp.float32(h_dim))
    keys = jax.random.split(key, 4)
    wih0 = jax.random.uniform(keys[0], (x_dim, 4 * h_dim), jnp.float32, -k, k)
    whh0 = jax.random.uniform(keys[1], (h_dim, 4 * h_dim), jnp.float32, -k, k)
    wih1 = jax.random.uniform(keys[2], (h_dim, 4 * h_dim), jnp.float32, -k, k)
    whh1 = jax.random.uniform(keys[3], (h_dim, 4 * h_dim), jnp.float32, -k, k)
    return pack_lstm_weights(wih0, whh0, wih1, whh1)


def policy_forward(x, m, w_packed):
    """JAX/Pallas equivalent of Policy.forward(x, m).

    x        : any shape flattening to X_DIM   (forward does x.view(1, 1, -1))
    m        : (h0, c0), each (2, 1, H)
    w_packed : (X + 3H, 4H) packed weight slab from init_policy_params
    returns (y, (h_n, c_n)) with y: (1, H), h_n/c_n: (2, 1, H)
    """
    H = w_packed.shape[1] // 4
    X = w_packed.shape[0] - 3 * H

    x_row = x.reshape(1, -1).astype(jnp.float32)                    # (1, X)
    h = m[0].reshape(2, H).astype(jnp.float32)
    c = m[1].reshape(2, H).astype(jnp.float32)

    # Fuse layer-0's two matmul inputs into one row (done once per call, in
    # XLA, so the kernel needs a single MXU dot for layer 0).
    row0 = jnp.concatenate([x_row, h[0:1]], axis=1)                 # (1, X+H)
    state = jnp.concatenate([h[1:2], c], axis=0)                    # (3, H)

    kernel = functools.partial(_lstm2_kernel, H=H, X=X)
    full = lambda shape: pl.BlockSpec(shape, lambda i: (0, 0))

    out = pl.pallas_call(
        kernel,
        grid=(1,),
        in_specs=[
            full((1, X + H)),
            full((3, H)),
            full((X + 3 * H, 4 * H)),
        ],
        out_specs=full((4, H)),
        out_shape=jax.ShapeDtypeStruct((4, H), jnp.float32),
        compiler_params=pltpu.CompilerParams(
            dimension_semantics=("arbitrary",)),
    )(row0, state, w_packed)

    y = out[1:2, :]                                   # top-layer hidden (== h[-1])
    h_n = out[0:2, :].reshape(2, 1, H)
    c_n = out[2:4, :].reshape(2, 1, H)
    return y, (h_n, c_n)


def _reference_forward(x, m, w_packed):
    """Pure-JAX reference (unpacks the weight slab) for correctness checking."""
    H = w_packed.shape[1] // 4
    X = w_packed.shape[0] - 3 * H
    wih0 = w_packed[0:X]
    whh0 = w_packed[X:X + H]
    whh1 = w_packed[X + H:X + 2 * H]
    wih1 = w_packed[X + 2 * H:X + 3 * H]

    x2d = x.reshape(1, -1).astype(jnp.float32)
    h = m[0].reshape(2, H).astype(jnp.float32)
    c = m[1].reshape(2, H).astype(jnp.float32)

    def cell(inp, hp, cp, w_ih, w_hh):
        g = inp @ w_ih + hp @ w_hh
        i, f, gg, o = (g[:, 0:H], g[:, H:2 * H], g[:, 2 * H:3 * H], g[:, 3 * H:4 * H])
        c_new = jax.nn.sigmoid(f) * cp + jax.nn.sigmoid(i) * jnp.tanh(gg)
        h_new = jax.nn.sigmoid(o) * jnp.tanh(c_new)
        return h_new, c_new

    h0n, c0n = cell(x2d, h[0:1], c[0:1], wih0, whh0)
    h1n, c1n = cell(h0n, h[1:2], c[1:2], wih1, whh1)
    return h1n, (jnp.stack([h0n[0], h1n[0]])[:, None, :],
                 jnp.stack([c0n[0], c1n[0]])[:, None, :])


if __name__ == "__main__":
    X_DIM = 32   # x_dim of Policy
    H_DIM = 32   # y_dim of Policy (hidden size); 4H = 128 lanes = one vreg

    root = jax.random.PRNGKey(0)
    k_param, k_x, k_h, k_c = jax.random.split(root, 4)

    w_packed = init_policy_params(k_param, X_DIM, H_DIM)

    # x can be any shape that flattens to X_DIM (forward does x.view(1, 1, -1))
    x = jax.random.normal(k_x, (4, 8), jnp.float32)
    # m as produced by Policy.get_m(): (rand(2,1,H), rand(2,1,H))
    m = (jax.random.uniform(k_h, (2, 1, H_DIM), jnp.float32),
         jax.random.uniform(k_c, (2, 1, H_DIM), jnp.float32))

    y, (h_n, c_n) = policy_forward(x, m, w_packed)
    jax.block_until_ready((y, h_n, c_n))

    # sanity check against pure-JAX reference (weights kept f32, tight tol)
    y_ref, (h_ref, c_ref) = _reference_forward(x, m, w_packed)
    assert y.shape == (1, H_DIM)
    assert h_n.shape == (2, 1, H_DIM) and c_n.shape == (2, 1, H_DIM)
    assert jnp.allclose(y, y_ref, atol=1e-5)
    assert jnp.allclose(h_n, h_ref, atol=1e-5)
    assert jnp.allclose(c_n, c_ref, atol=1e-5)

    print("KERNEL_OK")
</pallas_src>

<mosaic_0001>
module attributes {stable_mosaic.version = 11 : i64} {
  func.func @_lstm2_kernel(%arg0: i32, %arg1: memref<1x64xf32, #tpu.memory_space<vmem>>, %arg2: memref<3x32xf32, #tpu.memory_space<vmem>>, %arg3: memref<128x128xf32, #tpu.memory_space<vmem>>, %arg4: memref<4x32xf32, #tpu.memory_space<vmem>>) attributes {dimension_semantics = [#tpu.dimension_semantics<arbitrary>], iteration_bounds = array<i64: 1>, scalar_prefetch = 0 : i64, scratch_operands = 0 : i64, tpu.core_type = #tpu.core_type<tc>, window_params = [{pipeline_mode = #tpu.pipeline_mode<synchronous>, transform_indices = @transform_0, window_bounds = array<i64: 1, 64>}, {pipeline_mode = #tpu.pipeline_mode<synchronous>, transform_indices = @transform_1, window_bounds = array<i64: 3, 32>}, {pipeline_mode = #tpu.pipeline_mode<synchronous>, transform_indices = @transform_2, window_bounds = array<i64: 128, 128>}, {pipeline_mode = #tpu.pipeline_mode<synchronous>, transform_indices = @transform_3, window_bounds = array<i64: 4, 32>}]} {
    %c0 = arith.constant 0 : index
    %c0_0 = arith.constant 0 : index
    %0 = vector.load %arg1[%c0, %c0_0] : memref<1x64xf32, #tpu.memory_space<vmem>>, vector<1x64xf32>
    %c0_1 = arith.constant 0 : index
    %c0_2 = arith.constant 0 : index
    %1 = vector.load %arg2[%c0_1, %c0_2] : memref<3x32xf32, #tpu.memory_space<vmem>>, vector<1x32xf32>
    %c1 = arith.constant 1 : index
    %c0_3 = arith.constant 0 : index
    %2 = vector.load %arg2[%c1, %c0_3] : memref<3x32xf32, #tpu.memory_space<vmem>>, vector<1x32xf32>
    %c2 = arith.constant 2 : index
    %c0_4 = arith.constant 0 : index
    %3 = vector.load %arg2[%c2, %c0_4] : memref<3x32xf32, #tpu.memory_space<vmem>>, vector<1x32xf32>
    %c0_5 = arith.constant 0 : index
    %c0_6 = arith.constant 0 : index
    %4 = vector.load %arg3[%c0_5, %c0_6] : memref<128x128xf32, #tpu.memory_space<vmem>>, vector<64x128xf32>
    %c64 = arith.constant 64 : index
    %c0_7 = arith.constant 0 : index
    %5 = vector.load %arg3[%c64, %c0_7] : memref<128x128xf32, #tpu.memory_space<vmem>>, vector<32x128xf32>
    %c96 = arith.constant 96 : index
    %c0_8 = arith.constant 0 : index
    %6 = vector.load %arg3[%c96, %c0_8] : memref<128x128xf32, #tpu.memory_space<vmem>>, vector<32x128xf32>
    %cst = arith.constant dense<0.000000e+00> : vector<1x128xf32>
    %7 = tpu.matmul %0, %4, %cst {dimension_numbers = #tpu.dot_dimension_numbers<[1], [0], [0], [1], [0, 0, 1, 1], [], []>} : vector<1x64xf32>, vector<64x128xf32>, vector<1x128xf32> -> vector<1x128xf32>
    %cst_9 = arith.constant dense<0.000000e+00> : vector<1x128xf32>
    %8 = tpu.matmul %1, %5, %cst_9 {dimension_numbers = #tpu.dot_dimension_numbers<[1], [0], [0], [1], [0, 0, 1, 1], [], []>} : vector<1x32xf32>, vector<32x128xf32>, vector<1x128xf32> -> vector<1x128xf32>
    %9 = arith.negf %7 : vector<1x128xf32>
    %10 = math.exp %9 : vector<1x128xf32>
    %cst_10 = arith.constant 1.000000e+00 : f32
    %11 = vector.broadcast %cst_10 : f32 to vector<1x128xf32>
    %12 = arith.addf %11, %10 : vector<1x128xf32>
    %13 = arith.divf %11, %12 : vector<1x128xf32>
    %14 = math.tanh %7 : vector<1x128xf32>
    %15 = vector.extract_strided_slice %13 {offsets = [0, 0], sizes = [1, 32], strides = [1, 1]} : vector<1x128xf32> to vector<1x32xf32>
    %16 = vector.extract_strided_slice %13 {offsets = [0, 32], sizes = [1, 32], strides = [1, 1]} : vector<1x128xf32> to vector<1x32xf32>
    %17 = vector.extract_strided_slice %14 {offsets = [0, 64], sizes = [1, 32], strides = [1, 1]} : vector<1x128xf32> to vector<1x32xf32>
    %18 = vector.extract_strided_slice %13 {offsets = [0, 96], sizes = [1, 32], strides = [1, 1]} : vector<1x128xf32> to vector<1x32xf32>
    %19 = arith.mulf %16, %2 : vector<1x32xf32>
    %20 = arith.mulf %15, %17 : vector<1x32xf32>
    %21 = arith.addf %19, %20 : vector<1x32xf32>
    %22 = math.tanh %21 : vector<1x32xf32>
    %23 = arith.mulf %18, %22 : vector<1x32xf32>
    %cst_11 = arith.constant dense<0.000000e+00> : vector<1x128xf32>
    %24 = tpu.matmul %23, %6, %cst_11 {dimension_numbers = #tpu.dot_dimension_numbers<[1], [0], [0], [1], [0, 0, 1, 1], [], []>} : vector<1x32xf32>, vector<32x128xf32>, vector<1x128xf32> -> vector<1x128xf32>
    %25 = arith.addf %8, %24 : vector<1x128xf32>
    %26 = arith.negf %25 : vector<1x128xf32>
    %27 = math.exp %26 : vector<1x128xf32>
    %cst_12 = arith.constant 1.000000e+00 : f32
    %28 = vector.broadcast %cst_12 : f32 to vector<1x128xf32>
    %29 = arith.addf %28, %27 : vector<1x128xf32>
    %30 = arith.divf %28, %29 : vector<1x128xf32>
    %31 = math.tanh %25 : vector<1x128xf32>
    %32 = vector.extract_strided_slice %30 {offsets = [0, 0], sizes = [1, 32], strides = [1, 1]} : vector<1x128xf32> to vector<1x32xf32>
    %33 = vector.extract_strided_slice %30 {offsets = [0, 32], sizes = [1, 32], strides = [1, 1]} : vector<1x128xf32> to vector<1x32xf32>
    %34 = vector.extract_strided_slice %31 {offsets = [0, 64], sizes = [1, 32], strides = [1, 1]} : vector<1x128xf32> to vector<1x32xf32>
    %35 = vector.extract_strided_slice %30 {offsets = [0, 96], sizes = [1, 32], strides = [1, 1]} : vector<1x128xf32> to vector<1x32xf32>
    %36 = arith.mulf %33, %3 : vector<1x32xf32>
    %37 = arith.mulf %32, %34 : vector<1x32xf32>
    %38 = arith.addf %36, %37 : vector<1x32xf32>
    %39 = math.tanh %38 : vector<1x32xf32>
    %40 = arith.mulf %35, %39 : vector<1x32xf32>
    %c0_13 = arith.constant 0 : index
    %c0_14 = arith.constant 0 : index
    %41 = vector.load %arg4[%c0_13, %c0_14] : memref<4x32xf32, #tpu.memory_space<vmem>>, vector<1x32xf32>
    tpu.vector_store %arg4[%c0_13, %c0_14], %23 {strides = array<i32>} : memref<4x32xf32, #tpu.memory_space<vmem>>, vector<1x32xf32>,
    %c1_15 = arith.constant 1 : index
    %c0_16 = arith.constant 0 : index
    %42 = vector.load %arg4[%c1_15, %c0_16] : memref<4x32xf32, #tpu.memory_space<vmem>>, vector<1x32xf32>
    tpu.vector_store %arg4[%c1_15, %c0_16], %40 {strides = array<i32>} : memref<4x32xf32, #tpu.memory_space<vmem>>, vector<1x32xf32>,
    %c2_17 = arith.constant 2 : index
    %c0_18 = arith.constant 0 : index
    %43 = vector.load %arg4[%c2_17, %c0_18] : memref<4x32xf32, #tpu.memory_space<vmem>>, vector<1x32xf32>
    tpu.vector_store %arg4[%c2_17, %c0_18], %21 {strides = array<i32>} : memref<4x32xf32, #tpu.memory_space<vmem>>, vector<1x32xf32>,
    %c3 = arith.constant 3 : index
    %c0_19 = arith.constant 0 : index
    %44 = vector.load %arg4[%c3, %c0_19] : memref<4x32xf32, #tpu.memory_space<vmem>>, vector<1x32xf32>
    tpu.vector_store %arg4[%c3, %c0_19], %38 {strides = array<i32>} : memref<4x32xf32, #tpu.memory_space<vmem>>, vector<1x32xf32>,
    return
  }
  func.func @transform_0(%arg0: i32) -> (i32, i32) {
    %c0_i32 = arith.constant 0 : i32
    %c0_i32_0 = arith.constant 0 : i32
    %c0_i32_1 = arith.constant 0 : i32
    return %c0_i32, %c0_i32_0 : i32, i32
  }
  func.func @transform_1(%arg0: i32) -> (i32, i32) {
    %c0_i32 = arith.constant 0 : i32
    %c0_i32_0 = arith.constant 0 : i32
    %c0_i32_1 = arith.constant 0 : i32
    return %c0_i32, %c0_i32_0 : i32, i32
  }
  func.func @transform_2(%arg0: i32) -> (i32, i32) {
    %c0_i32 = arith.constant 0 : i32
    %c0_i32_0 = arith.constant 0 : i32
    %c0_i32_1 = arith.constant 0 : i32
    return %c0_i32, %c0_i32_0 : i32, i32
  }
  func.func @transform_3(%arg0: i32) -> (i32, i32) {
    %c0_i32 = arith.constant 0 : i32
    %c0_i32_0 = arith.constant 0 : i32
    %c0_i32_1 = arith.constant 0 : i32
    return %c0_i32, %c0_i32_0 : i32, i32
  }
}

</mosaic_0001>

<llo_original>
// kernel: tpu_custom_call.1
$region0: #{tpu_custom_call.1}
  #allocation0 [shape = 'u32[]', space=smem, size = 0x4, offset = 0x4, fixed_abs, tag = 'smem constant byte address 0x4 - core index']
  #allocation1 [shape = 'u32[144,128]{1,0:T(1,128)}', space=vmem, size = 0x12000, scoped, tag = 'internal scratch']
  %s0 = inlined_call_operand.hbm [shape: f32[1,64], index: 0, kind: input, shape index: {}]
  %s1 = inlined_call_operand.hbm [shape: f32[3,32], index: 1, kind: input, shape index: {}]
  %s2 = inlined_call_operand.hbm [shape: f32[128,128], index: 2, kind: input, shape index: {}]
  %s3 = inlined_call_operand.hbm [shape: f32[4,32], index: 3, kind: output, shape index: {}]
  %s4 = sld [smem:[#allocation0]]
  $region34: #{tpu_custom_call.1} parent=0
    _
  %s6 = ssub.s32 1, %s4
  %s7 = scalar_select 0, %s6, %s4
  $region1: #{tpu_custom_call.1} parent=0
    #allocation2 [shape = 'u8[512]{0}', space=vmem, size = 0x400, scoped, tag = 'input window, operand 0, single buffered']
    #allocation3 [shape = 's32[1]{0}', space=sflag, size = 0x4, scoped, tag = 'scoped memory for tpu_custom_call.1']
    #allocation4 [shape = 's32[1]{0}', space=sflag, size = 0x4, scoped, tag = 'scoped memory for tpu_custom_call.1']
    #allocation5 [shape = 'u8[2048]{0}', space=vmem, size = 0x800, scoped, tag = 'input window, operand 1, single buffered']
    #allocation6 [shape = 's32[1]{0}', space=sflag, size = 0x4, scoped, tag = 'scoped memory for tpu_custom_call.1']
    #allocation7 [shape = 'u8[65536]{0}', space=vmem, size = 0x10000, scoped, tag = 'input window, operand 2, single buffered']
    #allocation8 [shape = 'u8[2048]{0}', space=vmem, size = 0x800, scoped, tag = 'output window, operand 0, single buffered']
    %8 = vsyncpa [#allocation3], 0
    %9 = vsyncpa [#allocation6], 0
    %10 = vsyncpa [#allocation4], 0
    // Predicated region
    $region2: #{tpu_custom_call.1} parent=1 // pred_check
      _
    $region3: #{tpu_custom_call.1} parent=1 // pred_check_branch
      %12 = sbr.rel (0) target = $region5
    $region4: #{tpu_custom_call.1} parent=1 // pred_region
      %s14 = ssub.s32 16, 16
      %15 = vsyncadd [#allocation3], %s14
      %s17 = sshll.u32 [#allocation2], 4
      %s18 = int_to_ptr.vmem [resolvable:$true] %s17
      %20 = dma.hbm_to_vmem [thread:$0]  %s0, 16, %s18, [#allocation3]
    $region5: #{tpu_custom_call.1} parent=1 // pred_fallthru
      _
    // Predicated region
    $region6: #{tpu_custom_call.1} parent=1 // pred_check
      _
    $region7: #{tpu_custom_call.1} parent=1 // pred_check_branch
      %22 = sbr.rel (0) target = $region9
    $region8: #{tpu_custom_call.1} parent=1 // pred_region
      %s24 = ssub.s32 64, 64
      %25 = vsyncadd [#allocation6], %s24
      %s27 = sshll.u32 [#allocation5], 4
      %s28 = int_to_ptr.vmem [resolvable:$true] %s27
      %30 = dma.hbm_to_vmem [thread:$0]  %s1, 64, %s28, [#allocation6]
    $region9: #{tpu_custom_call.1} parent=1 // pred_fallthru
      _
    // Predicated region
    $region10: #{tpu_custom_call.1} parent=1 // pred_check
      _
    $region11: #{tpu_custom_call.1} parent=1 // pred_check_branch
      %32 = sbr.rel (0) target = $region13
    $region12: #{tpu_custom_call.1} parent=1 // pred_region
      %s34 = ssub.s32 2048, 2048
      %35 = vsyncadd [#allocation6], %s34
      %s36 = sshll.u32 [#allocation7], 4
      %s37 = int_to_ptr.vmem [resolvable:$true] %s36
      %42 = dma.hbm_to_vmem [thread:$0]  %s2, 2048, %s37, [#allocation6], 128, 128, 8
    $region13: #{tpu_custom_call.1} parent=1 // pred_fallthru
      _
    // Predicated region
    $region14: #{tpu_custom_call.1} parent=1 // pred_check
      _
    $region15: #{tpu_custom_call.1} parent=1 // pred_check_branch
      %44 = sbr.rel (0) target = $region17
    $region16: #{tpu_custom_call.1} parent=1 // pred_region
      %45 = dma.done [#allocation3], 16
    $region17: #{tpu_custom_call.1} parent=1 // pred_fallthru
      _
    // Predicated region
    $region18: #{tpu_custom_call.1} parent=1 // pred_check
      _
    $region19: #{tpu_custom_call.1} parent=1 // pred_check_branch
      %47 = sbr.rel (0) target = $region21
    $region20: #{tpu_custom_call.1} parent=1 // pred_region
      %48 = dma.done [#allocation6], 64
    $region21: #{tpu_custom_call.1} parent=1 // pred_fallthru
      _
    // Predicated region
    $region22: #{tpu_custom_call.1} parent=1 // pred_check
      _
    $region23: #{tpu_custom_call.1} parent=1 // pred_check_branch
      %50 = sbr.rel (0) target = $region25
    $region24: #{tpu_custom_call.1} parent=1 // pred_region
      %51 = dma.done [#allocation6], 2048
    $region25: #{tpu_custom_call.1} parent=1 // pred_fallthru
      _
    %v52 = vld [vmem:[#allocation2] sm:$0x1]
    %v53 = vld [vmem:[#allocation5] sm:$0x1]
    %v54 = vld [vmem:[#allocation5 + $0x1] sm:$0x1]
    %v55 = vld [vmem:[#allocation5 + $0x2] sm:$0x1]
    %v56 = vld [vmem:[#allocation7] sm:$0xff]
    %v57 = vld [vmem:[#allocation7 + $0x8] sm:$0xff]
    %v58 = vld [vmem:[#allocation7 + $0x10] sm:$0xff]
    %v59 = vld [vmem:[#allocation7 + $0x18] sm:$0xff]
    %v60 = vld [vmem:[#allocation7 + $0x20] sm:$0xff]
    %v61 = vld [vmem:[#allocation7 + $0x28] sm:$0xff]
    %v62 = vld [vmem:[#allocation7 + $0x30] sm:$0xff]
    %v63 = vld [vmem:[#allocation7 + $0x38] sm:$0xff]
    %v64 = vld [vmem:[#allocation7 + $0x40] sm:$0xff]
    %v65 = vld [vmem:[#allocation7 + $0x48] sm:$0xff]
    %v66 = vld [vmem:[#allocation7 + $0x50] sm:$0xff]
    %v67 = vld [vmem:[#allocation7 + $0x58] sm:$0xff]
    %v68 = vld [vmem:[#allocation7 + $0x60] sm:$0xff]
    %v69 = vld [vmem:[#allocation7 + $0x68] sm:$0xff]
    %v70 = vld [vmem:[#allocation7 + $0x70] sm:$0xff]
    %v71 = vld [vmem:[#allocation7 + $0x78] sm:$0xff]
    %vm72 = vcmask 523264
    %v74 = vsel %vm72, %v52, 0
    %76 = vmatprep.subr.mxu0 0.0
    %77 = vmatpush1.msra.mxu0 0.0
    %78 = vmatprep.subr.mxu0 0.0
    %79 = vmatpush1.msra.mxu0 0.0
    %80 = vmatprep.subr.mxu0 0.0
    %81 = vmatpush1.msra.mxu0 0.0
    %82 = vmatprep.subr.mxu0 0.0
    %83 = vmatpush1.msra.mxu0 0.0
    %84 = vmatprep.subr.mxu0 0.0
    %85 = vmatpush1.msra.mxu0 0.0
    %86 = vmatprep.subr.mxu0 0.0
    %87 = vmatpush1.msra.mxu0 0.0
    %88 = vmatprep.subr.mxu0 0.0
    %89 = vmatpush1.msra.mxu0 0.0
    %90 = vmatprep.subr.mxu0 0.0
    %91 = vmatpush1.msra.mxu0 0.0
    %92 = vmatprep.subr.mxu0 0.0
    %93 = vmatpush1.msra.mxu0 %v63
    %94 = vmatprep.subr.mxu0 0.0
    %95 = vmatpush1.msra.mxu0 %v62
    %96 = vmatprep.subr.mxu0 0.0
    %97 = vmatpush1.msra.mxu0 %v61
    %98 = vmatprep.subr.mxu0 0.0
    %99 = vmatpush1.msra.mxu0 %v60
    %100 = vmatprep.subr.mxu0 0.0
    %101 = vmatpush1.msra.mxu0 %v59
    %102 = vmatprep.subr.mxu0 0.0
    %103 = vmatpush1.msra.mxu0 %v58
    %104 = vmatprep.subr.mxu0 0.0
    %105 = vmatpush1.msra.mxu0 %v57
    %106 = vmatprep.subr.mxu0 0.0
    %107 = vmatpush1.msra.mxu0 %v56
    %108 = vmatprep.subr.mxu0 0.0
    %109 = vmatpush2.msra.mxu0 0.0
    %110 = vmatprep.subr.mxu0 0.0
    %111 = vmatpush2.msra.mxu0 0.0
    %112 = vmatprep.subr.mxu0 0.0
    %113 = vmatpush2.msra.mxu0 0.0
    %114 = vmatprep.subr.mxu0 0.0
    %115 = vmatpush2.msra.mxu0 0.0
    %116 = vmatprep.subr.mxu0 0.0
    %117 = vmatpush2.msra.mxu0 0.0
    %118 = vmatprep.subr.mxu0 0.0
    %119 = vmatpush2.msra.mxu0 0.0
    %120 = vmatprep.subr.mxu0 0.0
    %121 = vmatpush2.msra.mxu0 0.0
    %122 = vmatprep.subr.mxu0 0.0
    %123 = vmatpush2.msra.mxu0 0.0
    %124 = vmatprep.subr.mxu0 0.0
    %125 = vmatpush2.msra.mxu0 0.0
    %126 = vmatprep.subr.mxu0 0.0
    %127 = vmatpush2.msra.mxu0 0.0
    %128 = vmatprep.subr.mxu0 0.0
    %129 = vmatpush2.msra.mxu0 0.0
    %130 = vmatprep.subr.mxu0 0.0
    %131 = vmatpush2.msra.mxu0 0.0
    %132 = vmatprep.subr.mxu0 0.0
    %133 = vmatpush2.msra.mxu0 0.0
    %134 = vmatprep.subr.mxu0 0.0
    %135 = vmatpush2.msra.mxu0 0.0
    %136 = vmatprep.subr.mxu0 0.0
    %137 = vmatpush2.msra.mxu0 0.0
    %138 = vmatprep.subr.mxu0 0.0
    %139 = vmatpush2.msra.mxu0 0.0
    %140 = vmatprep.mubr.f32.mxu0 0.0
    %141 = vmatmul.mubr.f32.gmra.mxu0 %v74
    %v142 = vpop.f32.mrf.mxu0
    %v143 = vadd.f32 0.0, %v142
    %v144 = vpop.f32.mrf.mxu0
    %145 = vdwg.mxu0
    %v146 = vxor.u32 %v143, 2147483648
    %v147 = vmul.f32 %v146, 1.442695
    %v148 = vpow.pop %v147
    %v149 = vadd.f32 %v148, 1.0
    %v150 = vrcp.pop %v149
    %v151 = vmul.f32 1.0, %v150
    %v152 = vtanh.pop %v143
    %154 = vrot.lane.b32.xlu0 %v54, 32
    %v155 = vpop.permute.xlu0 %154
    %v157 = vmul.f32 %v151, %v155
    %159 = vrot.lane.b32.xlu0 %v152, 64
    %v160 = vpop.permute.xlu0 %159
    %v162 = vmul.f32 %v151, %v160
    %164 = vrot.lane.b32.xlu0 %v162, 32
    %v165 = vpop.permute.xlu0 %164
    %v167 = vadd.f32 %v157, %v165
    %v168 = vtanh.pop %v167
    %170 = vrot.lane.b32.xlu0 %v168, 64
    %v171 = vpop.permute.xlu0 %170
    %v173 = vmul.f32 %v151, %v171
    %175 = vrot.lane.b32.xlu0 %v173, 32
    %v176 = vpop.permute.xlu0 %175
    %vm177 = vcmask 261120
    %v178 = vsel %vm177, %v176, 0
    %180 = vmatprep.subr.mxu0 0.0
    %181 = vmatpush1.msra.mxu0 0.0
    %182 = vmatprep.subr.mxu0 0.0
    %183 = vmatpush1.msra.mxu0 0.0
    %184 = vmatprep.subr.mxu0 0.0
    %185 = vmatpush1.msra.mxu0 0.0
    %186 = vmatprep.subr.mxu0 0.0
    %187 = vmatpush1.msra.mxu0 0.0
    %188 = vmatprep.subr.mxu0 0.0
    %189 = vmatpush1.msra.mxu0 0.0
    %190 = vmatprep.subr.mxu0 0.0
    %191 = vmatpush1.msra.mxu0 0.0
    %192 = vmatprep.subr.mxu0 0.0
    %193 = vmatpush1.msra.mxu0 0.0
    %194 = vmatprep.subr.mxu0 0.0
    %195 = vmatpush1.msra.mxu0 0.0
    %196 = vmatprep.subr.mxu0 0.0
    %197 = vmatpush1.msra.mxu0 0.0
    %198 = vmatprep.subr.mxu0 0.0
    %199 = vmatpush1.msra.mxu0 0.0
    %200 = vmatprep.subr.mxu0 0.0
    %201 = vmatpush1.msra.mxu0 0.0
    %202 = vmatprep.subr.mxu0 0.0
    %203 = vmatpush1.msra.mxu0 0.0
    %204 = vmatprep.subr.mxu0 0.0
    %205 = vmatpush1.msra.mxu0 %v71
    %206 = vmatprep.subr.mxu0 0.0
    %207 = vmatpush1.msra.mxu0 %v70
    %208 = vmatprep.subr.mxu0 0.0
    %209 = vmatpush1.msra.mxu0 %v69
    %210 = vmatprep.subr.mxu0 0.0
    %211 = vmatpush1.msra.mxu0 %v68
    %212 = vmatprep.subr.mxu0 0.0
    %213 = vmatpush2.msra.mxu0 0.0
    %214 = vmatprep.subr.mxu0 0.0
    %215 = vmatpush2.msra.mxu0 0.0
    %216 = vmatprep.subr.mxu0 0.0
    %217 = vmatpush2.msra.mxu0 0.0
    %218 = vmatprep.subr.mxu0 0.0
    %219 = vmatpush2.msra.mxu0 0.0
    %220 = vmatprep.subr.mxu0 0.0
    %221 = vmatpush2.msra.mxu0 0.0
    %222 = vmatprep.subr.mxu0 0.0
    %223 = vmatpush2.msra.mxu0 0.0
    %224 = vmatprep.subr.mxu0 0.0
    %225 = vmatpush2.msra.mxu0 0.0
    %226 = vmatprep.subr.mxu0 0.0
    %227 = vmatpush2.msra.mxu0 0.0
    %228 = vmatprep.subr.mxu0 0.0
    %229 = vmatpush2.msra.mxu0 0.0
    %230 = vmatprep.subr.mxu0 0.0
    %231 = vmatpush2.msra.mxu0 0.0
    %232 = vmatprep.subr.mxu0 0.0
    %233 = vmatpush2.msra.mxu0 0.0
    %234 = vmatprep.subr.mxu0 0.0
    %235 = vmatpush2.msra.mxu0 0.0
    %236 = vmatprep.subr.mxu0 0.0
    %237 = vmatpush2.msra.mxu0 0.0
    %238 = vmatprep.subr.mxu0 0.0
    %239 = vmatpush2.msra.mxu0 0.0
    %240 = vmatprep.subr.mxu0 0.0
    %241 = vmatpush2.msra.mxu0 0.0
    %242 = vmatprep.subr.mxu0 0.0
    %243 = vmatpush2.msra.mxu0 0.0
    %244 = vmatprep.mubr.f32.mxu0 0.0
    %245 = vmatmul.mubr.f32.gmra.mxu0 %v178
    %v246 = vpop.f32.mrf.mxu0
    %v247 = vadd.f32 0.0, %v246
    %v248 = vpop.f32.mrf.mxu0
    %249 = vdwg.mxu0
    %v251 = vsel %vm177, %v53, 0
    %253 = vmatprep.subr.mxu0 0.0
    %254 = vmatpush1.msra.mxu0 0.0
    %255 = vmatprep.subr.mxu0 0.0
    %256 = vmatpush1.msra.mxu0 0.0
    %257 = vmatprep.subr.mxu0 0.0
    %258 = vmatpush1.msra.mxu0 0.0
    %259 = vmatprep.subr.mxu0 0.0
    %260 = vmatpush1.msra.mxu0 0.0
    %261 = vmatprep.subr.mxu0 0.0
    %262 = vmatpush1.msra.mxu0 0.0
    %263 = vmatprep.subr.mxu0 0.0
    %264 = vmatpush1.msra.mxu0 0.0
    %265 = vmatprep.subr.mxu0 0.0
    %266 = vmatpush1.msra.mxu0 0.0
    %267 = vmatprep.subr.mxu0 0.0
    %268 = vmatpush1.msra.mxu0 0.0
    %269 = vmatprep.subr.mxu0 0.0
    %270 = vmatpush1.msra.mxu0 0.0
    %271 = vmatprep.subr.mxu0 0.0
    %272 = vmatpush1.msra.mxu0 0.0
    %273 = vmatprep.subr.mxu0 0.0
    %274 = vmatpush1.msra.mxu0 0.0
    %275 = vmatprep.subr.mxu0 0.0
    %276 = vmatpush1.msra.mxu0 0.0
    %277 = vmatprep.subr.mxu0 0.0
    %278 = vmatpush1.msra.mxu0 %v67
    %279 = vmatprep.subr.mxu0 0.0
    %280 = vmatpush1.msra.mxu0 %v66
    %281 = vmatprep.subr.mxu0 0.0
    %282 = vmatpush1.msra.mxu0 %v65
    %283 = vmatprep.subr.mxu0 0.0
    %284 = vmatpush1.msra.mxu0 %v64
    %285 = vmatprep.subr.mxu0 0.0
    %286 = vmatpush2.msra.mxu0 0.0
    %287 = vmatprep.subr.mxu0 0.0
    %288 = vmatpush2.msra.mxu0 0.0
    %289 = vmatprep.subr.mxu0 0.0
    %290 = vmatpush2.msra.mxu0 0.0
    %291 = vmatprep.subr.mxu0 0.0
    %292 = vmatpush2.msra.mxu0 0.0
    %293 = vmatprep.subr.mxu0 0.0
    %294 = vmatpush2.msra.mxu0 0.0
    %295 = vmatprep.subr.mxu0 0.0
    %296 = vmatpush2.msra.mxu0 0.0
    %297 = vmatprep.subr.mxu0 0.0
    %298 = vmatpush2.msra.mxu0 0.0
    %299 = vmatprep.subr.mxu0 0.0
    %300 = vmatpush2.msra.mxu0 0.0
    %301 = vmatprep.subr.mxu0 0.0
    %302 = vmatpush2.msra.mxu0 0.0
    %303 = vmatprep.subr.mxu0 0.0
    %304 = vmatpush2.msra.mxu0 0.0
    %305 = vmatprep.subr.mxu0 0.0
    %306 = vmatpush2.msra.mxu0 0.0
    %307 = vmatprep.subr.mxu0 0.0
    %308 = vmatpush2.msra.mxu0 0.0
    %309 = vmatprep.subr.mxu0 0.0
    %310 = vmatpush2.msra.mxu0 0.0
    %311 = vmatprep.subr.mxu0 0.0
    %312 = vmatpush2.msra.mxu0 0.0
    %313 = vmatprep.subr.mxu0 0.0
    %314 = vmatpush2.msra.mxu0 0.0
    %315 = vmatprep.subr.mxu0 0.0
    %316 = vmatpush2.msra.mxu0 0.0
    %317 = vmatprep.mubr.f32.mxu0 0.0
    %318 = vmatmul.mubr.f32.gmra.mxu0 %v251
    %v319 = vpop.f32.mrf.mxu0
    %v320 = vadd.f32 %v247, %v319
    %v321 = vpop.f32.mrf.mxu0
    %322 = vdwg.mxu0
    %v323 = vxor.u32 %v320, 2147483648
    %v324 = vmul.f32 %v323, 1.442695
    %v325 = vpow.pop %v324
    %v326 = vadd.f32 %v325, 1.0
    %v327 = vrcp.pop %v326
    %v328 = vmul.f32 1.0, %v327
    %v329 = vtanh.pop %v320
    %331 = vrot.lane.b32.xlu0 %v55, 32
    %v332 = vpop.permute.xlu0 %331
    %v334 = vmul.f32 %v328, %v332
    %336 = vrot.lane.b32.xlu0 %v329, 64
    %v337 = vpop.permute.xlu0 %336
    %v339 = vmul.f32 %v328, %v337
    %341 = vrot.lane.b32.xlu0 %v339, 32
    %v342 = vpop.permute.xlu0 %341
    %v344 = vadd.f32 %v334, %v342
    %v345 = vtanh.pop %v344
    %347 = vrot.lane.b32.xlu0 %v345, 64
    %v348 = vpop.permute.xlu0 %347
    %v350 = vmul.f32 %v328, %v348
    %vm352 = vcmask 253952
    %353 = vst.msk [vmem:[#allocation8] sm:$0x1] %vm352, %v176
    %355 = vrot.lane.b32.xlu0 %v350, 32
    %v356 = vpop.permute.xlu0 %355
    %358 = vst.msk [vmem:[#allocation8 + $0x1] sm:$0x1] %vm352, %v356
    %360 = vrot.lane.b32.xlu0 %v167, 96
    %v361 = vpop.permute.xlu0 %360
    %363 = vst.msk [vmem:[#allocation8 + $0x2] sm:$0x1] %vm352, %v361
    %365 = vrot.lane.b32.xlu0 %v344, 96
    %v366 = vpop.permute.xlu0 %365
    %368 = vst.msk [vmem:[#allocation8 + $0x3] sm:$0x1] %vm352, %v366
    // Predicated region
    $region26: #{tpu_custom_call.1} parent=1 // pred_check
      _
    $region27: #{tpu_custom_call.1} parent=1 // pred_check_branch
      %370 = sbr.rel (0) target = $region29
    $region28: #{tpu_custom_call.1} parent=1 // pred_region
      %s372 = ssub.s32 64, 64
      %373 = vsyncadd [#allocation4], %s372
      %s375 = sshll.u32 [#allocation8], 4
      %s376 = int_to_ptr.vmem [resolvable:$true] %s375
      %378 = dma.vmem_to_hbm [thread:$0]  %s376, 64, %s3, [#allocation4]
    $region29: #{tpu_custom_call.1} parent=1 // pred_fallthru
      _
    // Predicated region
    $region30: #{tpu_custom_call.1} parent=1 // pred_check
      _
    $region31: #{tpu_custom_call.1} parent=1 // pred_check_branch
      %380 = sbr.rel (0) target = $region33
    $region32: #{tpu_custom_call.1} parent=1 // pred_region
      %381 = dma.done [#allocation4], 64
    $region33: #{tpu_custom_call.1} parent=1 // pred_fallthru
      _
    %382 = vsyncpa [#allocation3], 1
    %383 = vsyncpa [#allocation6], 1
    %384 = vsyncpa [#allocation4], 1

</llo_original>
